<compile_context>
chip_gen: v5e
topology: v5e:2x2
jax: 0.10.0
libtpu: 0.0.40
codegen_flags: <defaults>
</compile_context>

<pallas_src>
import functools
import math

import jax
import jax.numpy as jnp
from jax import lax
from jax.experimental import pallas as pl
from jax.experimental.pallas import tpu as pltpu


def _round_up(x, m):
    return (x + m - 1) // m * m


def _embedding_kernel(ids_ref, lut_ref, pe_ref, out_ref, gathered_ref, *,
                      scale, s_pad, ts, vocab):
    # ids_ref     : (B * s_pad,) int32, SMEM (scalar-prefetched token ids)
    # lut_ref     : (V, D) f32, VMEM (whole table, resident, fetched once)
    # pe_ref      : (ts, D) f32, positional-encoding rows for this sequence tile
    # out_ref     : (1, ts, D) output tile
    # gathered_ref: (ts, D) f32 VMEM scratch holding the gathered LUT rows
    si = pl.program_id(0)
    b = pl.program_id(1)
    base = b * s_pad + si * ts

    def gather_row(t, carry):
        # Clamp so out-of-range ids cannot read outside the LUT allocation (nn.Embedding
        # would error/garbage; here the contract is "clamped to the last row").
        tok = jnp.clip(ids_ref[base + t], 0, vocab - 1)
        gathered_ref[pl.ds(t, 1), :] = lut_ref[pl.ds(tok, 1), :]
        return carry

    lax.fori_loop(0, ts, gather_row, 0, unroll=8)

    # Fully vectorised scale + positional-encoding add + cast over the whole (ts, D) tile.
    out_ref[...] = (gathered_ref[...] * scale + pe_ref[...]).astype(out_ref.dtype)[None]


def _build_call(B, s_pad, ts, V, D, out_dtype, kernel, vmem_limit, single_buffer_lut):
    lut_kwargs = {"pipeline_mode": pl.Buffered(1)} if single_buffer_lut else {}
    grid_spec = pltpu.PrefetchScalarGridSpec(
        num_scalar_prefetch=1,
        grid=(s_pad // ts, B),
        in_specs=[
            # Whole LUT, constant index_map -> resident in VMEM, fetched once.
            pl.BlockSpec((V, D), lambda si, b, ids: (0, 0), **lut_kwargs),
            # PE tile: constant over the inner batch axis -> no redundant re-DMA.
            pl.BlockSpec((ts, D), lambda si, b, ids: (si, 0)),
        ],
        out_specs=pl.BlockSpec((1, ts, D), lambda si, b, ids: (b, si, 0)),
        scratch_shapes=[pltpu.VMEM((ts, D), jnp.float32)],
    )
    return pl.pallas_call(
        kernel,
        grid_spec=grid_spec,
        out_shape=jax.ShapeDtypeStruct((B, s_pad, D), out_dtype),
        compiler_params=pltpu.CompilerParams(
            dimension_semantics=("parallel", "parallel"),
            vmem_limit_bytes=int(vmem_limit),
        ),
    )


def embedding_forward(token_ids, lut, pe, *, seq_tile=512, out_dtype=jnp.float32):
    """token_ids: int[B, S], lut: f32[V, D], pe: f32[max_len, D] -> out_dtype[B, S, D]."""
    B, S = token_ids.shape
    V, D = lut.shape
    scale = math.sqrt(D)

    # Sequence tile: sublane-dense (multiple of 8); 512 default keeps output stores lane-dense.
    ts = _round_up(S, 8) if S <= seq_tile else seq_tile
    s_pad = _round_up(S, ts)

    # ids are addressing data -> flat int32 vector, scalar-prefetched into SMEM.
    ids = token_ids.astype(jnp.int32)
    if s_pad != S:
        ids = jnp.pad(ids, ((0, 0), (0, s_pad - S)))          # padded positions sliced off below
    ids_flat = ids.reshape(B * s_pad)

    pe_rows = pe[:S].astype(jnp.float32)
    if s_pad != S:
        pe_rows = jnp.pad(pe_rows, ((0, s_pad - S), (0, 0)))

    # VMEM budget: LUT (allow 2 buffers in case single-buffering is unavailable) + double-buffered
    # PE/out tiles + gather scratch + slack, capped at physical VMEM minus Mosaic headroom.
    lut_bytes = V * D * 4
    tile_bytes = ts * D * 4
    out_tile_bytes = ts * D * jnp.dtype(out_dtype).itemsize
    try:
        vmem_cap = pltpu.get_tpu_info().vmem_capacity_bytes
    except Exception:
        vmem_cap = 64 << 20                                    # conservative: v7x per-TC VMEM
    needed = 2 * lut_bytes + 2 * tile_bytes + 2 * out_tile_bytes + tile_bytes + (4 << 20)
    vmem_limit = min(max(needed, 32 << 20), vmem_cap - (8 << 20))

    if lut_bytes > 0.6 * vmem_cap:
        # TODO(synk): non-resident fallback (per-row LUT BlockSpec driven by scalar-prefetched
        # ids with pl.Element(1) + pl.Buffered(3)) for very large vocabularies.
        raise NotImplementedError("embedding table too large for the resident-LUT kernel path")

    kernel = functools.partial(_embedding_kernel, scale=scale, s_pad=s_pad, ts=ts, vocab=V)
    args = (ids_flat, lut.astype(jnp.float32), pe_rows)
    try:
        out = _build_call(B, s_pad, ts, V, D, out_dtype, kernel, vmem_limit, True)(*args)
    except Exception:
        # pl.Buffered(1) not accepted by this JAX build: keep the (still fetched-once) default spec.
        out = _build_call(B, s_pad, ts, V, D, out_dtype, kernel, vmem_limit, False)(*args)

    return out if s_pad == S else out[:, :S, :]


def make_positional_encoding(max_len, model_depth):
    position = jnp.arange(0.0, max_len, dtype=jnp.float32)[:, None]          # (max_len, 1)
    div_term = jnp.exp(
        jnp.arange(0.0, model_depth, 2.0, dtype=jnp.float32)
        * (-(math.log(10000.0) / model_depth))
    )                                                                         # (D/2,)
    pe = jnp.zeros((max_len, model_depth), dtype=jnp.float32)
    pe = pe.at[:, 0::2].set(jnp.sin(position * div_term))
    pe = pe.at[:, 1::2].set(jnp.cos(position * div_term))
    return pe


if __name__ == "__main__":
    # Small, deterministic setup consistent with the module's forward:
    # x: int token ids [batch, seq]; lut: [vocab, model_depth]
    B, S = 2, 8
    vocab_size, model_depth = 64, 128
    max_len = 512  # only the first S rows are ever used (matches pe[:, :x.size(1)])

    key = jax.random.PRNGKey(0)
    k_lut, k_ids = jax.random.split(key)

    # nn.Embedding default init: N(0, 1)
    lut = jax.random.normal(k_lut, (vocab_size, model_depth), dtype=jnp.float32)
    token_ids = jax.random.randint(k_ids, (B, S), 0, vocab_size, dtype=jnp.int32)
    pe = make_positional_encoding(max_len, model_depth)

    out = embedding_forward(token_ids, lut, pe)
    out = jax.block_until_ready(out)

    # Reference check in plain JAX (same semantics as the PyTorch module)
    ref = lut[token_ids] * math.sqrt(model_depth) + pe[None, :S, :]
    assert out.shape == (B, S, model_depth)
    assert jnp.allclose(out, ref, atol=1e-4, rtol=1e-4), "mismatch vs reference"

    print("KERNEL_OK")
</pallas_src>

<mosaic_0001>
module attributes {stable_mosaic.version = 11 : i64} {
  func.func @_embedding_kernel(%arg0: i32, %arg1: i32, %arg2: memref<16xi32, #tpu.memory_space<smem>>, %arg3: memref<64x128xf32, #tpu.memory_space<vmem>>, %arg4: memref<8x128xf32, #tpu.memory_space<vmem>>, %arg5: memref<1x8x128xf32, #tpu.memory_space<vmem>>, %arg6: memref<8x128xf32, #tpu.memory_space<vmem>>) attributes {dimension_semantics = [#tpu.dimension_semantics<parallel>, #tpu.dimension_semantics<parallel>], iteration_bounds = array<i64: 1, 2>, scalar_prefetch = 1 : i64, scratch_operands = 1 : i64, tpu.core_type = #tpu.core_type<tc>, window_params = [{pipeline_mode = #tpu.pipeline_mode<synchronous>, transform_indices = @transform_0, window_bounds = array<i64: 64, 128>}, {transform_indices = @transform_1, window_bounds = array<i64: 8, 128>}, {transform_indices = @transform_2, window_bounds = array<i64: 1, 8, 128>}]} {
    %c8_i32 = arith.constant 8 : i32
    %0 = arith.muli %arg1, %c8_i32 : i32
    %c8_i32_0 = arith.constant 8 : i32
    %1 = arith.muli %arg0, %c8_i32_0 : i32
    %2 = arith.addi %0, %1 : i32
    %c0_i32 = arith.constant 0 : i32
    %3 = arith.addi %2, %c0_i32 : i32
    %4 = arith.index_cast %3 : i32 to index
    %5 = memref.load %arg2[%4] : memref<16xi32, #tpu.memory_space<smem>>
    %c0_i32_1 = arith.constant 0 : i32
    %c63_i32 = arith.constant 63 : i32
    %6 = arith.maxsi %c0_i32_1, %5 : i32
    %7 = arith.minsi %c63_i32, %6 : i32
    %8 = arith.index_cast %7 : i32 to index
    %c0 = arith.constant 0 : index
    %9 = vector.load %arg3[%8, %c0] : memref<64x128xf32, #tpu.memory_space<vmem>>, vector<1x128xf32>
    %10 = arith.index_cast %c0_i32 : i32 to index
    %c0_2 = arith.constant 0 : index
    %11 = vector.load %arg6[%10, %c0_2] : memref<8x128xf32, #tpu.memory_space<vmem>>, vector<1x128xf32>
    tpu.vector_store %arg6[%10, %c0_2], %9 {strides = array<i32>} : memref<8x128xf32, #tpu.memory_space<vmem>>, vector<1x128xf32>,
    %c1_i32 = arith.constant 1 : i32
    %12 = arith.addi %2, %c1_i32 : i32
    %13 = arith.index_cast %12 : i32 to index
    %14 = memref.load %arg2[%13] : memref<16xi32, #tpu.memory_space<smem>>
    %c0_i32_3 = arith.constant 0 : i32
    %c63_i32_4 = arith.constant 63 : i32
    %15 = arith.maxsi %c0_i32_3, %14 : i32
    %16 = arith.minsi %c63_i32_4, %15 : i32
    %17 = arith.index_cast %16 : i32 to index
    %c0_5 = arith.constant 0 : index
    %18 = vector.load %arg3[%17, %c0_5] : memref<64x128xf32, #tpu.memory_space<vmem>>, vector<1x128xf32>
    %19 = arith.index_cast %c1_i32 : i32 to index
    %c0_6 = arith.constant 0 : index
    %20 = vector.load %arg6[%19, %c0_6] : memref<8x128xf32, #tpu.memory_space<vmem>>, vector<1x128xf32>
    tpu.vector_store %arg6[%19, %c0_6], %18 {strides = array<i32>} : memref<8x128xf32, #tpu.memory_space<vmem>>, vector<1x128xf32>,
    %c2_i32 = arith.constant 2 : i32
    %21 = arith.addi %2, %c2_i32 : i32
    %22 = arith.index_cast %21 : i32 to index
    %23 = memref.load %arg2[%22] : memref<16xi32, #tpu.memory_space<smem>>
    %c0_i32_7 = arith.constant 0 : i32
    %c63_i32_8 = arith.constant 63 : i32
    %24 = arith.maxsi %c0_i32_7, %23 : i32
    %25 = arith.minsi %c63_i32_8, %24 : i32
    %26 = arith.index_cast %25 : i32 to index
    %c0_9 = arith.constant 0 : index
    %27 = vector.load %arg3[%26, %c0_9] : memref<64x128xf32, #tpu.memory_space<vmem>>, vector<1x128xf32>
    %28 = arith.index_cast %c2_i32 : i32 to index
    %c0_10 = arith.constant 0 : index
    %29 = vector.load %arg6[%28, %c0_10] : memref<8x128xf32, #tpu.memory_space<vmem>>, vector<1x128xf32>
    tpu.vector_store %arg6[%28, %c0_10], %27 {strides = array<i32>} : memref<8x128xf32, #tpu.memory_space<vmem>>, vector<1x128xf32>,
    %c3_i32 = arith.constant 3 : i32
    %30 = arith.addi %2, %c3_i32 : i32
    %31 = arith.index_cast %30 : i32 to index
    %32 = memref.load %arg2[%31] : memref<16xi32, #tpu.memory_space<smem>>
    %c0_i32_11 = arith.constant 0 : i32
    %c63_i32_12 = arith.constant 63 : i32
    %33 = arith.maxsi %c0_i32_11, %32 : i32
    %34 = arith.minsi %c63_i32_12, %33 : i32
    %35 = arith.index_cast %34 : i32 to index
    %c0_13 = arith.constant 0 : index
    %36 = vector.load %arg3[%35, %c0_13] : memref<64x128xf32, #tpu.memory_space<vmem>>, vector<1x128xf32>
    %37 = arith.index_cast %c3_i32 : i32 to index
    %c0_14 = arith.constant 0 : index
    %38 = vector.load %arg6[%37, %c0_14] : memref<8x128xf32, #tpu.memory_space<vmem>>, vector<1x128xf32>
    tpu.vector_store %arg6[%37, %c0_14], %36 {strides = array<i32>} : memref<8x128xf32, #tpu.memory_space<vmem>>, vector<1x128xf32>,
    %c4_i32 = arith.constant 4 : i32
    %39 = arith.addi %2, %c4_i32 : i32
    %40 = arith.index_cast %39 : i32 to index
    %41 = memref.load %arg2[%40] : memref<16xi32, #tpu.memory_space<smem>>
    %c0_i32_15 = arith.constant 0 : i32
    %c63_i32_16 = arith.constant 63 : i32
    %42 = arith.maxsi %c0_i32_15, %41 : i32
    %43 = arith.minsi %c63_i32_16, %42 : i32
    %44 = arith.index_cast %43 : i32 to index
    %c0_17 = arith.constant 0 : index
    %45 = vector.load %arg3[%44, %c0_17] : memref<64x128xf32, #tpu.memory_space<vmem>>, vector<1x128xf32>
    %46 = arith.index_cast %c4_i32 : i32 to index
    %c0_18 = arith.constant 0 : index
    %47 = vector.load %arg6[%46, %c0_18] : memref<8x128xf32, #tpu.memory_space<vmem>>, vector<1x128xf32>
    tpu.vector_store %arg6[%46, %c0_18], %45 {strides = array<i32>} : memref<8x128xf32, #tpu.memory_space<vmem>>, vector<1x128xf32>,
    %c5_i32 = arith.constant 5 : i32
    %48 = arith.addi %2, %c5_i32 : i32
    %49 = arith.index_cast %48 : i32 to index
    %50 = memref.load %arg2[%49] : memref<16xi32, #tpu.memory_space<smem>>
    %c0_i32_19 = arith.constant 0 : i32
    %c63_i32_20 = arith.constant 63 : i32
    %51 = arith.maxsi %c0_i32_19, %50 : i32
    %52 = arith.minsi %c63_i32_20, %51 : i32
    %53 = arith.index_cast %52 : i32 to index
    %c0_21 = arith.constant 0 : index
    %54 = vector.load %arg3[%53, %c0_21] : memref<64x128xf32, #tpu.memory_space<vmem>>, vector<1x128xf32>
    %55 = arith.index_cast %c5_i32 : i32 to index
    %c0_22 = arith.constant 0 : index
    %56 = vector.load %arg6[%55, %c0_22] : memref<8x128xf32, #tpu.memory_space<vmem>>, vector<1x128xf32>
    tpu.vector_store %arg6[%55, %c0_22], %54 {strides = array<i32>} : memref<8x128xf32, #tpu.memory_space<vmem>>, vector<1x128xf32>,
    %c6_i32 = arith.constant 6 : i32
    %57 = arith.addi %2, %c6_i32 : i32
    %58 = arith.index_cast %57 : i32 to index
    %59 = memref.load %arg2[%58] : memref<16xi32, #tpu.memory_space<smem>>
    %c0_i32_23 = arith.constant 0 : i32
    %c63_i32_24 = arith.constant 63 : i32
    %60 = arith.maxsi %c0_i32_23, %59 : i32
    %61 = arith.minsi %c63_i32_24, %60 : i32
    %62 = arith.index_cast %61 : i32 to index
    %c0_25 = arith.constant 0 : index
    %63 = vector.load %arg3[%62, %c0_25] : memref<64x128xf32, #tpu.memory_space<vmem>>, vector<1x128xf32>
    %64 = arith.index_cast %c6_i32 : i32 to index
    %c0_26 = arith.constant 0 : index
    %65 = vector.load %arg6[%64, %c0_26] : memref<8x128xf32, #tpu.memory_space<vmem>>, vector<1x128xf32>
    tpu.vector_store %arg6[%64, %c0_26], %63 {strides = array<i32>} : memref<8x128xf32, #tpu.memory_space<vmem>>, vector<1x128xf32>,
    %c7_i32 = arith.constant 7 : i32
    %66 = arith.addi %2, %c7_i32 : i32
    %67 = arith.index_cast %66 : i32 to index
    %68 = memref.load %arg2[%67] : memref<16xi32, #tpu.memory_space<smem>>
    %c0_i32_27 = arith.constant 0 : i32
    %c63_i32_28 = arith.constant 63 : i32
    %69 = arith.maxsi %c0_i32_27, %68 : i32
    %70 = arith.minsi %c63_i32_28, %69 : i32
    %71 = arith.index_cast %70 : i32 to index
    %c0_29 = arith.constant 0 : index
    %72 = vector.load %arg3[%71, %c0_29] : memref<64x128xf32, #tpu.memory_space<vmem>>, vector<1x128xf32>
    %73 = arith.index_cast %c7_i32 : i32 to index
    %c0_30 = arith.constant 0 : index
    %74 = vector.load %arg6[%73, %c0_30] : memref<8x128xf32, #tpu.memory_space<vmem>>, vector<1x128xf32>
    tpu.vector_store %arg6[%73, %c0_30], %72 {strides = array<i32>} : memref<8x128xf32, #tpu.memory_space<vmem>>, vector<1x128xf32>,
    %c8_i32_31 = arith.constant 8 : i32
    %c0_32 = arith.constant 0 : index
    %c0_33 = arith.constant 0 : index
    %75 = vector.load %arg6[%c0_32, %c0_33] : memref<8x128xf32, #tpu.memory_space<vmem>>, vector<8x128xf32>
    %cst = arith.constant 11.3137083 : f32
    %76 = vector.broadcast %cst : f32 to vector<8x128xf32>
    %77 = arith.mulf %75, %76 : vector<8x128xf32>
    %c0_34 = arith.constant 0 : index
    %c0_35 = arith.constant 0 : index
    %78 = vector.load %arg4[%c0_34, %c0_35] : memref<8x128xf32, #tpu.memory_space<vmem>>, vector<8x128xf32>
    %79 = arith.addf %77, %78 : vector<8x128xf32>
    %80 = vector.shape_cast %79 : vector<8x128xf32> to vector<1x8x128xf32>
    %c0_36 = arith.constant 0 : index
    %c0_37 = arith.constant 0 : index
    %c0_38 = arith.constant 0 : index
    %81 = vector.load %arg5[%c0_36, %c0_37, %c0_38] : memref<1x8x128xf32, #tpu.memory_space<vmem>>, vector<1x8x128xf32>
    tpu.vector_store %arg5[%c0_36, %c0_37, %c0_38], %80 {strides = array<i32>} : memref<1x8x128xf32, #tpu.memory_space<vmem>>, vector<1x8x128xf32>,
    return
  }
  func.func @transform_0(%arg0: i32, %arg1: i32, %arg2: memref<16xi32, #tpu.memory_space<smem>>) -> (i32, i32) {
    %c0_i32 = arith.constant 0 : i32
    %c0_i32_0 = arith.constant 0 : i32
    %c0_i32_1 = arith.constant 0 : i32
    return %c0_i32, %c0_i32_0 : i32, i32
  }
  func.func @transform_1(%arg0: i32, %arg1: i32, %arg2: memref<16xi32, #tpu.memory_space<smem>>) -> (i32, i32) {
    %c0_i32 = arith.constant 0 : i32
    %c0_i32_0 = arith.constant 0 : i32
    return %arg0, %c0_i32 : i32, i32
  }
  func.func @transform_2(%arg0: i32, %arg1: i32, %arg2: memref<16xi32, #tpu.memory_space<smem>>) -> (i32, i32, i32) {
    %c0_i32 = arith.constant 0 : i32
    %c0_i32_0 = arith.constant 0 : i32
    return %arg1, %arg0, %c0_i32 : i32, i32, i32
  }
}

module attributes {stable_mosaic.version = 11 : i64} {
  func.func @_embedding_kernel(%arg0: i32, %arg1: i32, %arg2: memref<16xi32, #tpu.memory_space<smem>>, %arg3: memref<64x128xf32, #tpu.memory_space<vmem>>, %arg4: memref<8x128xf32, #tpu.memory_space<vmem>>, %arg5: memref<1x8x128xf32, #tpu.memory_space<vmem>>, %arg6: memref<8x128xf32, #tpu.memory_space<vmem>>) attributes {dimension_semantics = [#tpu.dimension_semantics<parallel>, #tpu.dimension_semantics<parallel>], iteration_bounds = array<i64: 1, 2>, scalar_prefetch = 1 : i64, scratch_operands = 1 : i64, tpu.core_type = #tpu.core_type<tc>, window_params = [{pipeline_mode = #tpu.pipeline_mode<synchronous>, transform_indices = @transform_0, window_bounds = array<i64: 64, 128>}, {transform_indices = @transform_1, window_bounds = array<i64: 8, 128>}, {transform_indices = @transform_2, window_bounds = array<i64: 1, 8, 128>}]} {
    %c8_i32 = arith.constant 8 : i32
    %0 = arith.muli %arg1, %c8_i32 : i32
    %c8_i32_0 = arith.constant 8 : i32
    %1 = arith.muli %arg0, %c8_i32_0 : i32
    %2 = arith.addi %0, %1 : i32
    %c0_i32 = arith.constant 0 : i32
    %3 = arith.addi %2, %c0_i32 : i32
    %4 = arith.index_cast %3 : i32 to index
    %5 = memref.load %arg2[%4] : memref<16xi32, #tpu.memory_space<smem>>
    %c0_i32_1 = arith.constant 0 : i32
    %c63_i32 = arith.constant 63 : i32
    %6 = arith.maxsi %c0_i32_1, %5 : i32
    %7 = arith.minsi %c63_i32, %6 : i32
    %8 = arith.index_cast %7 : i32 to index
    %c0 = arith.constant 0 : index
    %9 = vector.load %arg3[%8, %c0] : memref<64x128xf32, #tpu.memory_space<vmem>>, vector<1x128xf32>
    %10 = arith.index_cast %c0_i32 : i32 to index
    %c0_2 = arith.constant 0 : index
    %11 = vector.load %arg6[%10, %c0_2] : memref<8x128xf32, #tpu.memory_space<vmem>>, vector<1x128xf32>
    tpu.vector_store %arg6[%10, %c0_2], %9 {strides = array<i32>} : memref<8x128xf32, #tpu.memory_space<vmem>>, vector<1x128xf32>,
    %c1_i32 = arith.constant 1 : i32
    %12 = arith.addi %2, %c1_i32 : i32
    %13 = arith.index_cast %12 : i32 to index
    %14 = memref.load %arg2[%13] : memref<16xi32, #tpu.memory_space<smem>>
    %c0_i32_3 = arith.constant 0 : i32
    %c63_i32_4 = arith.constant 63 : i32
    %15 = arith.maxsi %c0_i32_3, %14 : i32
    %16 = arith.minsi %c63_i32_4, %15 : i32
    %17 = arith.index_cast %16 : i32 to index
    %c0_5 = arith.constant 0 : index
    %18 = vector.load %arg3[%17, %c0_5] : memref<64x128xf32, #tpu.memory_space<vmem>>, vector<1x128xf32>
    %19 = arith.index_cast %c1_i32 : i32 to index
    %c0_6 = arith.constant 0 : index
    %20 = vector.load %arg6[%19, %c0_6] : memref<8x128xf32, #tpu.memory_space<vmem>>, vector<1x128xf32>
    tpu.vector_store %arg6[%19, %c0_6], %18 {strides = array<i32>} : memref<8x128xf32, #tpu.memory_space<vmem>>, vector<1x128xf32>,
    %c2_i32 = arith.constant 2 : i32
    %21 = arith.addi %2, %c2_i32 : i32
    %22 = arith.index_cast %21 : i32 to index
    %23 = memref.load %arg2[%22] : memref<16xi32, #tpu.memory_space<smem>>
    %c0_i32_7 = arith.constant 0 : i32
    %c63_i32_8 = arith.constant 63 : i32
    %24 = arith.maxsi %c0_i32_7, %23 : i32
    %25 = arith.minsi %c63_i32_8, %24 : i32
    %26 = arith.index_cast %25 : i32 to index
    %c0_9 = arith.constant 0 : index
    %27 = vector.load %arg3[%26, %c0_9] : memref<64x128xf32, #tpu.memory_space<vmem>>, vector<1x128xf32>
    %28 = arith.index_cast %c2_i32 : i32 to index
    %c0_10 = arith.constant 0 : index
    %29 = vector.load %arg6[%28, %c0_10] : memref<8x128xf32, #tpu.memory_space<vmem>>, vector<1x128xf32>
    tpu.vector_store %arg6[%28, %c0_10], %27 {strides = array<i32>} : memref<8x128xf32, #tpu.memory_space<vmem>>, vector<1x128xf32>,
    %c3_i32 = arith.constant 3 : i32
    %30 = arith.addi %2, %c3_i32 : i32
    %31 = arith.index_cast %30 : i32 to index
    %32 = memref.load %arg2[%31] : memref<16xi32, #tpu.memory_space<smem>>
    %c0_i32_11 = arith.constant 0 : i32
    %c63_i32_12 = arith.constant 63 : i32
    %33 = arith.maxsi %c0_i32_11, %32 : i32
    %34 = arith.minsi %c63_i32_12, %33 : i32
    %35 = arith.index_cast %34 : i32 to index
    %c0_13 = arith.constant 0 : index
    %36 = vector.load %arg3[%35, %c0_13] : memref<64x128xf32, #tpu.memory_space<vmem>>, vector<1x128xf32>
    %37 = arith.index_cast %c3_i32 : i32 to index
    %c0_14 = arith.constant 0 : index
    %38 = vector.load %arg6[%37, %c0_14] : memref<8x128xf32, #tpu.memory_space<vmem>>, vector<1x128xf32>
    tpu.vector_store %arg6[%37, %c0_14], %36 {strides = array<i32>} : memref<8x128xf32, #tpu.memory_space<vmem>>, vector<1x128xf32>,
    %c4_i32 = arith.constant 4 : i32
    %39 = arith.addi %2, %c4_i32 : i32
    %40 = arith.index_cast %39 : i32 to index
    %41 = memref.load %arg2[%40] : memref<16xi32, #tpu.memory_space<smem>>
    %c0_i32_15 = arith.constant 0 : i32
    %c63_i32_16 = arith.constant 63 : i32
    %42 = arith.maxsi %c0_i32_15, %41 : i32
    %43 = arith.minsi %c63_i32_16, %42 : i32
    %44 = arith.index_cast %43 : i32 to index
    %c0_17 = arith.constant 0 : index
    %45 = vector.load %arg3[%44, %c0_17] : memref<64x128xf32, #tpu.memory_space<vmem>>, vector<1x128xf32>
    %46 = arith.index_cast %c4_i32 : i32 to index
    %c0_18 = arith.constant 0 : index
    %47 = vector.load %arg6[%46, %c0_18] : memref<8x128xf32, #tpu.memory_space<vmem>>, vector<1x128xf32>
    tpu.vector_store %arg6[%46, %c0_18], %45 {strides = array<i32>} : memref<8x128xf32, #tpu.memory_space<vmem>>, vector<1x128xf32>,
    %c5_i32 = arith.constant 5 : i32
    %48 = arith.addi %2, %c5_i32 : i32
    %49 = arith.index_cast %48 : i32 to index
    %50 = memref.load %arg2[%49] : memref<16xi32, #tpu.memory_space<smem>>
    %c0_i32_19 = arith.constant 0 : i32
    %c63_i32_20 = arith.constant 63 : i32
    %51 = arith.maxsi %c0_i32_19, %50 : i32
    %52 = arith.minsi %c63_i32_20, %51 : i32
    %53 = arith.index_cast %52 : i32 to index
    %c0_21 = arith.constant 0 : index
    %54 = vector.load %arg3[%53, %c0_21] : memref<64x128xf32, #tpu.memory_space<vmem>>, vector<1x128xf32>
    %55 = arith.index_cast %c5_i32 : i32 to index
    %c0_22 = arith.constant 0 : index
    %56 = vector.load %arg6[%55, %c0_22] : memref<8x128xf32, #tpu.memory_space<vmem>>, vector<1x128xf32>
    tpu.vector_store %arg6[%55, %c0_22], %54 {strides = array<i32>} : memref<8x128xf32, #tpu.memory_space<vmem>>, vector<1x128xf32>,
    %c6_i32 = arith.constant 6 : i32
    %57 = arith.addi %2, %c6_i32 : i32
    %58 = arith.index_cast %57 : i32 to index
    %59 = memref.load %arg2[%58] : memref<16xi32, #tpu.memory_space<smem>>
    %c0_i32_23 = arith.constant 0 : i32
    %c63_i32_24 = arith.constant 63 : i32
    %60 = arith.maxsi %c0_i32_23, %59 : i32
    %61 = arith.minsi %c63_i32_24, %60 : i32
    %62 = arith.index_cast %61 : i32 to index
    %c0_25 = arith.constant 0 : index
    %63 = vector.load %arg3[%62, %c0_25] : memref<64x128xf32, #tpu.memory_space<vmem>>, vector<1x128xf32>
    %64 = arith.index_cast %c6_i32 : i32 to index
    %c0_26 = arith.constant 0 : index
    %65 = vector.load %arg6[%64, %c0_26] : memref<8x128xf32, #tpu.memory_space<vmem>>, vector<1x128xf32>
    tpu.vector_store %arg6[%64, %c0_26], %63 {strides = array<i32>} : memref<8x128xf32, #tpu.memory_space<vmem>>, vector<1x128xf32>,
    %c7_i32 = arith.constant 7 : i32
    %66 = arith.addi %2, %c7_i32 : i32
    %67 = arith.index_cast %66 : i32 to index
    %68 = memref.load %arg2[%67] : memref<16xi32, #tpu.memory_space<smem>>
    %c0_i32_27 = arith.constant 0 : i32
    %c63_i32_28 = arith.constant 63 : i32
    %69 = arith.maxsi %c0_i32_27, %68 : i32
    %70 = arith.minsi %c63_i32_28, %69 : i32
    %71 = arith.index_cast %70 : i32 to index
    %c0_29 = arith.constant 0 : index
    %72 = vector.load %arg3[%71, %c0_29] : memref<64x128xf32, #tpu.memory_space<vmem>>, vector<1x128xf32>
    %73 = arith.index_cast %c7_i32 : i32 to index
    %c0_30 = arith.constant 0 : index
    %74 = vector.load %arg6[%73, %c0_30] : memref<8x128xf32, #tpu.memory_space<vmem>>, vector<1x128xf32>
    tpu.vector_store %arg6[%73, %c0_30], %72 {strides = array<i32>} : memref<8x128xf32, #tpu.memory_space<vmem>>, vector<1x128xf32>,
    %c8_i32_31 = arith.constant 8 : i32
    %c0_32 = arith.constant 0 : index
    %c0_33 = arith.constant 0 : index
    %75 = vector.load %arg6[%c0_32, %c0_33] : memref<8x128xf32, #tpu.memory_space<vmem>>, vector<8x128xf32>
    %cst = arith.constant 11.3137083 : f32
    %76 = vector.broadcast %cst : f32 to vector<8x128xf32>
    %77 = arith.mulf %75, %76 : vector<8x128xf32>
    %c0_34 = arith.constant 0 : index
    %c0_35 = arith.constant 0 : index
    %78 = vector.load %arg4[%c0_34, %c0_35] : memref<8x128xf32, #tpu.memory_space<vmem>>, vector<8x128xf32>
    %79 = arith.addf %77, %78 : vector<8x128xf32>
    %80 = vector.shape_cast %79 : vector<8x128xf32> to vector<1x8x128xf32>
    %c0_36 = arith.constant 0 : index
    %c0_37 = arith.constant 0 : index
    %c0_38 = arith.constant 0 : index
    %81 = vector.load %arg5[%c0_36, %c0_37, %c0_38] : memref<1x8x128xf32, #tpu.memory_space<vmem>>, vector<1x8x128xf32>
    tpu.vector_store %arg5[%c0_36, %c0_37, %c0_38], %80 {strides = array<i32>} : memref<1x8x128xf32, #tpu.memory_space<vmem>>, vector<1x8x128xf32>,
    return
  }
  func.func @transform_0(%arg0: i32, %arg1: i32, %arg2: memref<16xi32, #tpu.memory_space<smem>>) -> (i32, i32) {
    %c0_i32 = arith.constant 0 : i32
    %c0_i32_0 = arith.constant 0 : i32
    %c0_i32_1 = arith.constant 0 : i32
    return %c0_i32, %c0_i32_0 : i32, i32
  }
  func.func @transform_1(%arg0: i32, %arg1: i32, %arg2: memref<16xi32, #tpu.memory_space<smem>>) -> (i32, i32) {
    %c0_i32 = arith.constant 0 : i32
    %c0_i32_0 = arith.constant 0 : i32
    return %arg0, %c0_i32 : i32, i32
  }
  func.func @transform_2(%arg0: i32, %arg1: i32, %arg2: memref<16xi32, #tpu.memory_space<smem>>) -> (i32, i32, i32) {
    %c0_i32 = arith.constant 0 : i32
    %c0_i32_0 = arith.constant 0 : i32
    return %arg1, %arg0, %c0_i32 : i32, i32, i32
  }
}

</mosaic_0001>

<llo_original>
// kernel: tpu_custom_call.1
$region0: #{tpu_custom_call.1}
  #allocation0 [shape = 'u32[]', space=smem, size = 0x4, offset = 0x4, fixed_abs, tag = 'smem constant byte address 0x4 - core index']
  #allocation1 [shape = 'u32[72,128]{1,0:T(1,128)}', space=vmem, size = 0x9000, scoped, tag = 'internal scratch']
  #allocation2 [shape = 'f32[8,128]{1,0:T(8,128)}', space=vmem, size = 0x1000, scoped, tag = 'scratch operand']
  #allocation3 [shape = 's32[1]{0}', space=sflag, size = 0x4, scoped, tag = 'scoped memory for tpu_custom_call.1']
  #allocation4 [shape = 'u8[512]{0}', space=smem, size = 0x200, scoped, tag = 'prefetched SMEM operand 0']
  %s0 = inlined_call_operand.hbm [shape: s32[16], index: 0, kind: input, shape index: {}]
  %s1 = inlined_call_operand.hbm [shape: f32[64,128], index: 1, kind: input, shape index: {}]
  %s2 = inlined_call_operand.hbm [shape: f32[8,128], index: 2, kind: input, shape index: {}]
  %s3 = inlined_call_operand.hbm [shape: f32[2,8,128], index: 3, kind: output, shape index: {}]
  %s4 = sld [smem:[#allocation0]]
  $region49: #{tpu_custom_call.1} parent=0
    _
  %s6 = ssub.s32 1, %s4
  %s7 = scalar_select 0, %s6, %s4
  %s9 = sshll.u32 %s0, 4
  %s10 = int_to_ptr.hbm [resolvable:$true] %s9
  %12 = dma.hbm_to_smem %s10, 16, [#allocation4], [#allocation3]
  %14 = dma.done [#allocation3], 16
  %15 = sfence
  $region1: #{tpu_custom_call.1} parent=0
    #allocation5 [shape = 'u8[32768]{0}', space=vmem, size = 0x8000, scoped, tag = 'input window, operand 1, single buffered']
    #allocation6 [shape = 's32[2]{0}', space=sflag, size = 0x8, scoped, tag = 'scoped memory for tpu_custom_call.1']
    #allocation7 [shape = 's32[2]{0}', space=sflag, size = 0x8, scoped, tag = 'scoped memory for tpu_custom_call.1']
    #allocation8 [shape = 'u8[4096]{0}', space=vmem, size = 0x1000, scoped, tag = 'input window, operand 2, single buffered']
    #allocation9 [shape = 's32[1]{0}', space=sflag, size = 0x4, scoped, tag = 'scoped memory for tpu_custom_call.1']
    #allocation10 [shape = 'u8[8192]{0}', space=vmem, size = 0x2000, scoped, tag = 'output window, operand 0']
    %16 = vsyncpa [#allocation6], 0
    %17 = vsyncpa [#allocation9], 0
    %18 = vsyncpa [#allocation7], 0
    %s19 = scalar_lea.sflag [#allocation7], 1
    %20 = vsyncpa %s19, 0
    loop: start=0, step=1, limit=4
    $region2: #{tpu_custom_call.1} parent=1 // loop_pre_header
      _
    $region3: #{tpu_custom_call.1} parent=1 // loop_header
      %s22 = sphi 0, %s26
      %p23 = scmp.ge.s32.totalorder %s22, 4
      %s29 = sphi 0, %s41
      %s30 = sphi 0, %s37
      %s31 = sphi 0, %s29
      %s32 = sphi 0, %s30
      %s33 = sphi 0, %s31
      %s34 = sphi 0, %s32
      %s42 = sphi 0, %s42
      %s44 = sphi 0, %s42
      %s45 = sphi 0, %s44
      %s59 = sphi 0, %s45
      %s65 = sphi 0, %s67
      %s68 = sphi 0, %s65
      %s69 = sphi 0, %s68
      %s85 = sphi 0, %s69
      %s93 = sphi 0, %s95
      %s96 = sphi 0, %s93
      %s97 = sphi 0, %s96
      %s113 = sphi 0, %s97
    $region4: #{tpu_custom_call.1} parent=1 // loop_header_branch
      %25 = sbr.rel (%p23) target = $region8
    $region5: #{tpu_custom_call.1} parent=1 // loop_body
      %s27 = ssub.s32 %s22, 1
      %s28 = ssub.s32 %s22, 2
      %s35 = sadd.s32 1, %s30
      %p36 = scmp.ge.s32.totalorder %s35, 2
      %s37 = scalar_select %p36, 0, %s35
      %s38 = sadd.s32 1, %s29
      %s39 = scalar_select %p36, %s38, %s29
      %p40 = scmp.ge.s32.totalorder %s39, 1
      %s41 = scalar_select %p40, 0, %s39
      %s43 = sadd.s32 %s42, 1
      %p46 = scmp.eq.s32.totalorder %s22, 1
      %p47 = scmp.ne.s32.totalorder %s42, %s44
      %p48 = scmp.eq.s32.totalorder %s22, 0
      %p49 = por %p47, %p48
      %p50 = scmp.ne.s32.totalorder %s42, %s44
      %p51 = scmp.eq.s32.totalorder %s27, 1
      %p52 = por %p50, %p51
      %p53 = scmp.ne.s32.totalorder %s44, %s45
      %p54 = scmp.eq.s32.totalorder %s27, 0
      %p55 = por %p53, %p54
      %p56 = scmp.ne.s32.totalorder %s44, %s45
      %p57 = scmp.eq.s32.totalorder %s28, 1
      %p58 = por %p56, %p57
      %p60 = scmp.ne.s32.totalorder %s45, %s59
      %p61 = scmp.eq.s32.totalorder %s28, 0
      %p62 = por %p60, %p61
      %s63 = ssub.s32 %s29, %s41
      %p64 = scmp.eq.s32.totalorder %s63, 0
      %s66 = sadd.s32 %s65, 1
      %s67 = scalar_select %p64, %s65, %s66
      %p70 = pneg %p64
      %p71 = scmp.eq.s32.totalorder %s22, 1
      %p72 = por %p70, %p71
      %p73 = scmp.ne.s32.totalorder %s65, %s68
      %p74 = scmp.eq.s32.totalorder %s22, 0
      %p75 = por %p73, %p74
      %p76 = scmp.ne.s32.totalorder %s65, %s68
      %p77 = scmp.eq.s32.totalorder %s27, 1
      %p78 = por %p76, %p77
      %p79 = scmp.ne.s32.totalorder %s68, %s69
      %p80 = scmp.eq.s32.totalorder %s27, 0
      %p81 = por %p79, %p80
      %p82 = scmp.ne.s32.totalorder %s68, %s69
      %p83 = scmp.eq.s32.totalorder %s28, 1
      %p84 = por %p82, %p83
      %p86 = scmp.ne.s32.totalorder %s69, %s85
      %p87 = scmp.eq.s32.totalorder %s28, 0
      %p88 = por %p86, %p87
      %s89 = ssub.s32 %s30, %s37
      %s90 = ssub.s32 %s29, %s41
      %s91 = sor.u32 %s89, %s90
      %p92 = scmp.eq.s32.totalorder %s91, 0
      %s94 = sadd.s32 %s93, 1
      %s95 = scalar_select %p92, %s93, %s94
      %p98 = pneg %p92
      %p99 = scmp.eq.s32.totalorder %s22, 1
      %p100 = por %p98, %p99
      %p101 = scmp.ne.s32.totalorder %s93, %s96
      %p102 = scmp.eq.s32.totalorder %s22, 0
      %p103 = por %p101, %p102
      %p104 = scmp.ne.s32.totalorder %s93, %s96
      %p105 = scmp.eq.s32.totalorder %s27, 1
      %p106 = por %p104, %p105
      %p107 = scmp.ne.s32.totalorder %s96, %s97
      %p108 = scmp.eq.s32.totalorder %s27, 0
      %p109 = por %p107, %p108
      %p110 = scmp.ne.s32.totalorder %s96, %s97
      %p111 = scmp.eq.s32.totalorder %s28, 1
      %p112 = por %p110, %p111
      %p114 = scmp.ne.s32.totalorder %s97, %s113
      %p115 = scmp.eq.s32.totalorder %s28, 0
      %p116 = por %p114, %p115
      %p117 = scmp.le.s32.totalorder 1, %s22
      %p118 = scmp.lt.s32.totalorder %s22, 3
      %p119 = pnand %p117, %p118
      %p120 = pneg %p119
      // Predicated region
      $region9: #{tpu_custom_call.1} parent=5 // pred_check
        _
      $region10: #{tpu_custom_call.1} parent=5 // pred_check_branch
        %122 = sbr.rel (%p119) target = $region12
      $region11: #{tpu_custom_call.1} parent=5 // pred_region
        %s123 = ssub.s32 %s22, 1
        // Predicated region
        $region13: #{tpu_custom_call.1} parent=11 // pred_check
          %p124 = pneg %p55
        $region14: #{tpu_custom_call.1} parent=11 // pred_check_branch
          %126 = sbr.rel (%p124) target = $region16
        $region15: #{tpu_custom_call.1} parent=11 // pred_region
          %128 = vsyncadd [#allocation6], 0
          %s129 = sshll.u32 %s1, 4
          %s130 = int_to_ptr.hbm [resolvable:$true] %s129
          %s131 = sshll.u32 [#allocation5], 4
          %s132 = int_to_ptr.vmem [resolvable:$true] %s131
          %137 = dma.hbm_to_vmem [thread:$0]  %s130, 1024, %s132, [#allocation6], 128, 128, 8
        $region16: #{tpu_custom_call.1} parent=11 // pred_fallthru
          _
        // Predicated region
        $region17: #{tpu_custom_call.1} parent=11 // pred_check
          %p138 = pneg %p81
        $region18: #{tpu_custom_call.1} parent=11 // pred_check_branch
          %140 = sbr.rel (%p138) target = $region20
        $region19: #{tpu_custom_call.1} parent=11 // pred_region
          %142 = vsyncadd [#allocation9], 0
          %s143 = smul.addr %s31, 8
          %s144 = scalar_lea.hbm %s2, %s143
          %s146 = sshll.u32 %s144, 4
          %s147 = int_to_ptr.hbm [resolvable:$true] %s146
          %s148 = sshll.u32 [#allocation8], 4
          %s149 = int_to_ptr.vmem [resolvable:$true] %s148
          %151 = dma.hbm_to_vmem [thread:$0]  %s147, 128, %s149, [#allocation9]
        $region20: #{tpu_custom_call.1} parent=11 // pred_fallthru
          _
      $region12: #{tpu_custom_call.1} parent=5 // pred_fallthru
        _
      %p152 = scmp.lt.s32.totalorder %s22, 2
      // Predicated region
      $region21: #{tpu_custom_call.1} parent=5 // pred_check
        %p153 = pneg %p152
      $region22: #{tpu_custom_call.1} parent=5 // pred_check_branch
        %155 = sbr.rel (%p153) target = $region24
      $region23: #{tpu_custom_call.1} parent=5 // pred_region
        _
      $region24: #{tpu_custom_call.1} parent=5 // pred_fallthru
        _
      %p156 = scmp.le.s32.totalorder 1, %s22
      %p157 = scmp.lt.s32.totalorder %s22, 3
      %p158 = pnand %p156, %p157
      %p159 = pneg %p158
      // Predicated region
      $region25: #{tpu_custom_call.1} parent=5 // pred_check
        _
      $region26: #{tpu_custom_call.1} parent=5 // pred_check_branch
        %161 = sbr.rel (%p158) target = $region28
      $region27: #{tpu_custom_call.1} parent=5 // pred_region
        %s162 = ssub.s32 %s22, 1
        // Predicated region
        $region29: #{tpu_custom_call.1} parent=27 // pred_check
          %p163 = pneg %p55
        $region30: #{tpu_custom_call.1} parent=27 // pred_check_branch
          %165 = sbr.rel (%p163) target = $region32
        $region31: #{tpu_custom_call.1} parent=27 // pred_region
          %167 = dma.done [#allocation6], 1024
        $region32: #{tpu_custom_call.1} parent=27 // pred_fallthru
          _
        // Predicated region
        $region33: #{tpu_custom_call.1} parent=27 // pred_check
          %p168 = pneg %p81
        $region34: #{tpu_custom_call.1} parent=27 // pred_check_branch
          %170 = sbr.rel (%p168) target = $region36
        $region35: #{tpu_custom_call.1} parent=27 // pred_region
          %172 = dma.done [#allocation9], 128
        $region36: #{tpu_custom_call.1} parent=27 // pred_fallthru
          _
        %p173 = pneg %p55
        %p174 = pneg %p52
        %p175 = pneg %p81
        %p176 = pneg %p78
        %p177 = pneg %p109
        %p178 = pneg %p106
        %s179 = sand.u32 %s96, 1
        %s180 = scalar_lea.sflag [#allocation7], %s179
        %s181 = sand.u32 %s96, 1
        %s182 = smul.addr %s181, 8
        %s183 = scalar_lea.vmem [#allocation10], %s182
        %s184 = smul.u32 %s32, 8
        %s185 = smul.u32 %s31, 8
        %s186 = sadd.s32 %s184, %s185
        %s187 = sld [smem:[#allocation4 + %s186]]
        %p188 = scmp.gt.s32.totalorder %s187, 0
        %s189 = scalar_select %p188, %s187, 0
        %p190 = scmp.lt.s32.totalorder %s189, 63
        %s191 = scalar_select %p190, %s189, 63
        %s192 = scalar_lea.vmem [#allocation5], %s191
        %v193 = vld [vmem:[%s192] sm:$0x1]
        %194 = vst [vmem:[#allocation2] sm:$0x1] %v193
        %s195 = sadd.s32 %s186, 1
        %s196 = sld [smem:[#allocation4 + %s195]]
        %p197 = scmp.gt.s32.totalorder %s196, 0
        %s198 = scalar_select %p197, %s196, 0
        %p199 = scmp.lt.s32.totalorder %s198, 63
        %s200 = scalar_select %p199, %s198, 63
        %s201 = scalar_lea.vmem [#allocation5], %s200
        %v202 = vld [vmem:[%s201] sm:$0x1]
        %203 = vst [vmem:[#allocation2 + $0x1] sm:$0x1] %v202
        %s204 = sadd.s32 %s186, 2
        %s205 = sld [smem:[#allocation4 + %s204]]
        %p206 = scmp.gt.s32.totalorder %s205, 0
        %s207 = scalar_select %p206, %s205, 0
        %p208 = scmp.lt.s32.totalorder %s207, 63
        %s209 = scalar_select %p208, %s207, 63
        %s210 = scalar_lea.vmem [#allocation5], %s209
        %v211 = vld [vmem:[%s210] sm:$0x1]
        %212 = vst [vmem:[#allocation2 + $0x2] sm:$0x1] %v211
        %s213 = sadd.s32 %s186, 3
        %s214 = sld [smem:[#allocation4 + %s213]]
        %p215 = scmp.gt.s32.totalorder %s214, 0
        %s216 = scalar_select %p215, %s214, 0
        %p217 = scmp.lt.s32.totalorder %s216, 63
        %s218 = scalar_select %p217, %s216, 63
        %s219 = scalar_lea.vmem [#allocation5], %s218
        %v220 = vld [vmem:[%s219] sm:$0x1]
        %221 = vst [vmem:[#allocation2 + $0x3] sm:$0x1] %v220
        %s222 = sadd.s32 %s186, 4
        %s223 = sld [smem:[#allocation4 + %s222]]
        %p224 = scmp.gt.s32.totalorder %s223, 0
        %s225 = scalar_select %p224, %s223, 0
        %p226 = scmp.lt.s32.totalorder %s225, 63
        %s227 = scalar_select %p226, %s225, 63
        %s228 = scalar_lea.vmem [#allocation5], %s227
        %v229 = vld [vmem:[%s228] sm:$0x1]
        %230 = vst [vmem:[#allocation2 + $0x4] sm:$0x1] %v229
        %s231 = sadd.s32 %s186, 5
        %s232 = sld [smem:[#allocation4 + %s231]]
        %p233 = scmp.gt.s32.totalorder %s232, 0
        %s234 = scalar_select %p233, %s232, 0
        %p235 = scmp.lt.s32.totalorder %s234, 63
        %s236 = scalar_select %p235, %s234, 63
        %s237 = scalar_lea.vmem [#allocation5], %s236
        %v238 = vld [vmem:[%s237] sm:$0x1]
        %239 = vst [vmem:[#allocation2 + $0x5] sm:$0x1] %v238
        %s240 = sadd.s32 %s186, 6
        %s241 = sld [smem:[#allocation4 + %s240]]
        %p242 = scmp.gt.s32.totalorder %s241, 0
        %s243 = scalar_select %p242, %s241, 0
        %p244 = scmp.lt.s32.totalorder %s243, 63
        %s245 = scalar_select %p244, %s243, 63
        %s246 = scalar_lea.vmem [#allocation5], %s245
        %v247 = vld [vmem:[%s246] sm:$0x1]
        %248 = vst [vmem:[#allocation2 + $0x6] sm:$0x1] %v247
        %s249 = sadd.s32 %s186, 7
        %s250 = sld [smem:[#allocation4 + %s249]]
        %p251 = scmp.gt.s32.totalorder %s250, 0
        %s252 = scalar_select %p251, %s250, 0
        %p253 = scmp.lt.s32.totalorder %s252, 63
        %s254 = scalar_select %p253, %s252, 63
        %s255 = scalar_lea.vmem [#allocation5], %s254
        %v256 = vld [vmem:[%s255] sm:$0x1]
        %257 = vst [vmem:[#allocation2 + $0x7] sm:$0x1] %v256
        %v258 = vld [vmem:[#allocation2] sm:$0xff]
        %v259 = vmul.f32 %v258, 11.313708
        %v260 = vld [vmem:[#allocation8] sm:$0xff]
        %v261 = vadd.f32 %v259, %v260
        %262 = vst [vmem:[%s183] sm:$0xff] %v261
        %s263 = sand.u32 %s96, 1
        %s264 = scalar_lea.sflag [#allocation7], %s263
        %s265 = sand.u32 %s96, 1
        %s266 = smul.addr %s265, 8
        %s267 = scalar_lea.vmem [#allocation10], %s266
        // Predicated region
        $region37: #{tpu_custom_call.1} parent=27 // pred_check
          %p268 = pneg %p106
        $region38: #{tpu_custom_call.1} parent=27 // pred_check_branch
          %270 = sbr.rel (%p268) target = $region40
        $region39: #{tpu_custom_call.1} parent=27 // pred_region
          %272 = vsyncadd %s264, 0
          %s273 = sadd.s32 %s31, %s32
          %s274 = smul.addr %s273, 8
          %s275 = scalar_lea.hbm %s3, %s274
          %s277 = sshll.u32 %s267, 4
          %s278 = int_to_ptr.vmem [resolvable:$true] %s277
          %s279 = sshll.u32 %s275, 4
          %s280 = int_to_ptr.hbm [resolvable:$true] %s279
          %282 = dma.vmem_to_hbm [thread:$0]  %s278, 128, %s280, %s264
        $region40: #{tpu_custom_call.1} parent=27 // pred_fallthru
          _
      $region28: #{tpu_custom_call.1} parent=5 // pred_fallthru
        _
      %p283 = scmp.le.s32.totalorder 2, %s22
      // Predicated region
      $region41: #{tpu_custom_call.1} parent=5 // pred_check
        %p284 = pneg %p283
      $region42: #{tpu_custom_call.1} parent=5 // pred_check_branch
        %286 = sbr.rel (%p284) target = $region44
      $region43: #{tpu_custom_call.1} parent=5 // pred_region
        %s287 = ssub.s32 %s22, 2
        // Predicated region
        $region45: #{tpu_custom_call.1} parent=43 // pred_check
          %p288 = pneg %p112
        $region46: #{tpu_custom_call.1} parent=43 // pred_check_branch
          %290 = sbr.rel (%p288) target = $region48
        $region47: #{tpu_custom_call.1} parent=43 // pred_region
          %s291 = sand.u32 %s97, 1
          %s292 = scalar_lea.sflag [#allocation7], %s291
          %s293 = sand.u32 %s97, 1
          %s294 = smul.addr %s293, 8
          %s295 = scalar_lea.vmem [#allocation10], %s294
          %297 = dma.done %s292, 128
        $region48: #{tpu_custom_call.1} parent=43 // pred_fallthru
          _
      $region44: #{tpu_custom_call.1} parent=5 // pred_fallthru
        _
    $region6: #{tpu_custom_call.1} parent=1 // loop_footer
      %s26 = sadd.s32 1, %s22
    $region7: #{tpu_custom_call.1} parent=1 // loop_footer_branch
      %21 = sbr.rel target = $region3
    $region8: #{tpu_custom_call.1} parent=1 // loop_exit
      _
    %298 = vsyncpa [#allocation6], 1
    %s299 = scalar_lea.sflag [#allocation6], 1
    %300 = vsyncpa %s299, 1
    %301 = vsyncpa [#allocation9], 1
    %302 = vsyncpa [#allocation7], 1
    %s303 = scalar_lea.sflag [#allocation7], 1
    %304 = vsyncpa %s303, 1

// kernel: tpu_custom_call.1
$region0: #{tpu_custom_call.1}
  #allocation0 [shape = 'u32[]', space=smem, size = 0x4, offset = 0x4, fixed_abs, tag = 'smem constant byte address 0x4 - core index']
  #allocation1 [shape = 'u32[72,128]{1,0:T(1,128)}', space=vmem, size = 0x9000, scoped, tag = 'internal scratch']
  #allocation2 [shape = 'f32[8,128]{1,0:T(8,128)}', space=vmem, size = 0x1000, scoped, tag = 'scratch operand']
  #allocation3 [shape = 's32[1]{0}', space=sflag, size = 0x4, scoped, tag = 'scoped memory for tpu_custom_call.1']
  #allocation4 [shape = 'u8[512]{0}', space=smem, size = 0x200, scoped, tag = 'prefetched SMEM operand 0']
  %s0 = inlined_call_operand.hbm [shape: s32[16], index: 0, kind: input, shape index: {}]
  %s1 = inlined_call_operand.hbm [shape: f32[64,128], index: 1, kind: input, shape index: {}]
  %s2 = inlined_call_operand.hbm [shape: f32[8,128], index: 2, kind: input, shape index: {}]
  %s3 = inlined_call_operand.hbm [shape: f32[2,8,128], index: 3, kind: output, shape index: {}]
  %s4 = sld [smem:[#allocation0]]
  $region49: #{tpu_custom_call.1} parent=0
    _
  %s6 = ssub.s32 1, %s4
  %s7 = scalar_select 0, %s6, %s4
  %s9 = sshll.u32 %s0, 4
  %s10 = int_to_ptr.hbm [resolvable:$true] %s9
  %12 = dma.hbm_to_smem %s10, 16, [#allocation4], [#allocation3]
  %14 = dma.done [#allocation3], 16
  %15 = sfence
  $region1: #{tpu_custom_call.1} parent=0
    #allocation5 [shape = 'u8[32768]{0}', space=vmem, size = 0x8000, scoped, tag = 'input window, operand 1, single buffered']
    #allocation6 [shape = 's32[2]{0}', space=sflag, size = 0x8, scoped, tag = 'scoped memory for tpu_custom_call.1']
    #allocation7 [shape = 's32[2]{0}', space=sflag, size = 0x8, scoped, tag = 'scoped memory for tpu_custom_call.1']
    #allocation8 [shape = 'u8[4096]{0}', space=vmem, size = 0x1000, scoped, tag = 'input window, operand 2, single buffered']
    #allocation9 [shape = 's32[1]{0}', space=sflag, size = 0x4, scoped, tag = 'scoped memory for tpu_custom_call.1']
    #allocation10 [shape = 'u8[8192]{0}', space=vmem, size = 0x2000, scoped, tag = 'output window, operand 0']
    %16 = vsyncpa [#allocation6], 0
    %17 = vsyncpa [#allocation9], 0
    %18 = vsyncpa [#allocation7], 0
    %s19 = scalar_lea.sflag [#allocation7], 1
    %20 = vsyncpa %s19, 0
    loop: start=0, step=1, limit=4
    $region2: #{tpu_custom_call.1} parent=1 // loop_pre_header
      _
    $region3: #{tpu_custom_call.1} parent=1 // loop_header
      %s22 = sphi 0, %s26
      %p23 = scmp.ge.s32.totalorder %s22, 4
      %s29 = sphi 0, %s41
      %s30 = sphi 0, %s37
      %s31 = sphi 0, %s29
      %s32 = sphi 0, %s30
      %s33 = sphi 0, %s31
      %s34 = sphi 0, %s32
      %s42 = sphi 0, %s42
      %s44 = sphi 0, %s42
      %s45 = sphi 0, %s44
      %s59 = sphi 0, %s45
      %s65 = sphi 0, %s67
      %s68 = sphi 0, %s65
      %s69 = sphi 0, %s68
      %s85 = sphi 0, %s69
      %s93 = sphi 0, %s95
      %s96 = sphi 0, %s93
      %s97 = sphi 0, %s96
      %s113 = sphi 0, %s97
    $region4: #{tpu_custom_call.1} parent=1 // loop_header_branch
      %25 = sbr.rel (%p23) target = $region8
    $region5: #{tpu_custom_call.1} parent=1 // loop_body
      %s27 = ssub.s32 %s22, 1
      %s28 = ssub.s32 %s22, 2
      %s35 = sadd.s32 1, %s30
      %p36 = scmp.ge.s32.totalorder %s35, 2
      %s37 = scalar_select %p36, 0, %s35
      %s38 = sadd.s32 1, %s29
      %s39 = scalar_select %p36, %s38, %s29
      %p40 = scmp.ge.s32.totalorder %s39, 1
      %s41 = scalar_select %p40, 0, %s39
      %s43 = sadd.s32 %s42, 1
      %p46 = scmp.eq.s32.totalorder %s22, 1
      %p47 = scmp.ne.s32.totalorder %s42, %s44
      %p48 = scmp.eq.s32.totalorder %s22, 0
      %p49 = por %p47, %p48
      %p50 = scmp.ne.s32.totalorder %s42, %s44
      %p51 = scmp.eq.s32.totalorder %s27, 1
      %p52 = por %p50, %p51
      %p53 = scmp.ne.s32.totalorder %s44, %s45
      %p54 = scmp.eq.s32.totalorder %s27, 0
      %p55 = por %p53, %p54
      %p56 = scmp.ne.s32.totalorder %s44, %s45
      %p57 = scmp.eq.s32.totalorder %s28, 1
      %p58 = por %p56, %p57
      %p60 = scmp.ne.s32.totalorder %s45, %s59
      %p61 = scmp.eq.s32.totalorder %s28, 0
      %p62 = por %p60, %p61
      %s63 = ssub.s32 %s29, %s41
      %p64 = scmp.eq.s32.totalorder %s63, 0
      %s66 = sadd.s32 %s65, 1
      %s67 = scalar_select %p64, %s65, %s66
      %p70 = pneg %p64
      %p71 = scmp.eq.s32.totalorder %s22, 1
      %p72 = por %p70, %p71
      %p73 = scmp.ne.s32.totalorder %s65, %s68
      %p74 = scmp.eq.s32.totalorder %s22, 0
      %p75 = por %p73, %p74
      %p76 = scmp.ne.s32.totalorder %s65, %s68
      %p77 = scmp.eq.s32.totalorder %s27, 1
      %p78 = por %p76, %p77
      %p79 = scmp.ne.s32.totalorder %s68, %s69
      %p80 = scmp.eq.s32.totalorder %s27, 0
      %p81 = por %p79, %p80
      %p82 = scmp.ne.s32.totalorder %s68, %s69
      %p83 = scmp.eq.s32.totalorder %s28, 1
      %p84 = por %p82, %p83
      %p86 = scmp.ne.s32.totalorder %s69, %s85
      %p87 = scmp.eq.s32.totalorder %s28, 0
      %p88 = por %p86, %p87
      %s89 = ssub.s32 %s30, %s37
      %s90 = ssub.s32 %s29, %s41
      %s91 = sor.u32 %s89, %s90
      %p92 = scmp.eq.s32.totalorder %s91, 0
      %s94 = sadd.s32 %s93, 1
      %s95 = scalar_select %p92, %s93, %s94
      %p98 = pneg %p92
      %p99 = scmp.eq.s32.totalorder %s22, 1
      %p100 = por %p98, %p99
      %p101 = scmp.ne.s32.totalorder %s93, %s96
      %p102 = scmp.eq.s32.totalorder %s22, 0
      %p103 = por %p101, %p102
      %p104 = scmp.ne.s32.totalorder %s93, %s96
      %p105 = scmp.eq.s32.totalorder %s27, 1
      %p106 = por %p104, %p105
      %p107 = scmp.ne.s32.totalorder %s96, %s97
      %p108 = scmp.eq.s32.totalorder %s27, 0
      %p109 = por %p107, %p108
      %p110 = scmp.ne.s32.totalorder %s96, %s97
      %p111 = scmp.eq.s32.totalorder %s28, 1
      %p112 = por %p110, %p111
      %p114 = scmp.ne.s32.totalorder %s97, %s113
      %p115 = scmp.eq.s32.totalorder %s28, 0
      %p116 = por %p114, %p115
      %p117 = scmp.le.s32.totalorder 1, %s22
      %p118 = scmp.lt.s32.totalorder %s22, 3
      %p119 = pnand %p117, %p118
      %p120 = pneg %p119
      // Predicated region
      $region9: #{tpu_custom_call.1} parent=5 // pred_check
        _
      $region10: #{tpu_custom_call.1} parent=5 // pred_check_branch
        %122 = sbr.rel (%p119) target = $region12
      $region11: #{tpu_custom_call.1} parent=5 // pred_region
        %s123 = ssub.s32 %s22, 1
        // Predicated region
        $region13: #{tpu_custom_call.1} parent=11 // pred_check
          %p124 = pneg %p55
        $region14: #{tpu_custom_call.1} parent=11 // pred_check_branch
          %126 = sbr.rel (%p124) target = $region16
        $region15: #{tpu_custom_call.1} parent=11 // pred_region
          %128 = vsyncadd [#allocation6], 0
          %s129 = sshll.u32 %s1, 4
          %s130 = int_to_ptr.hbm [resolvable:$true] %s129
          %s131 = sshll.u32 [#allocation5], 4
          %s132 = int_to_ptr.vmem [resolvable:$true] %s131
          %137 = dma.hbm_to_vmem [thread:$0]  %s130, 1024, %s132, [#allocation6], 128, 128, 8
        $region16: #{tpu_custom_call.1} parent=11 // pred_fallthru
          _
        // Predicated region
        $region17: #{tpu_custom_call.1} parent=11 // pred_check
          %p138 = pneg %p81
        $region18: #{tpu_custom_call.1} parent=11 // pred_check_branch
          %140 = sbr.rel (%p138) target = $region20
        $region19: #{tpu_custom_call.1} parent=11 // pred_region
          %142 = vsyncadd [#allocation9], 0
          %s143 = smul.addr %s31, 8
          %s144 = scalar_lea.hbm %s2, %s143
          %s146 = sshll.u32 %s144, 4
          %s147 = int_to_ptr.hbm [resolvable:$true] %s146
          %s148 = sshll.u32 [#allocation8], 4
          %s149 = int_to_ptr.vmem [resolvable:$true] %s148
          %151 = dma.hbm_to_vmem [thread:$0]  %s147, 128, %s149, [#allocation9]
        $region20: #{tpu_custom_call.1} parent=11 // pred_fallthru
          _
      $region12: #{tpu_custom_call.1} parent=5 // pred_fallthru
        _
      %p152 = scmp.lt.s32.totalorder %s22, 2
      // Predicated region
      $region21: #{tpu_custom_call.1} parent=5 // pred_check
        %p153 = pneg %p152
      $region22: #{tpu_custom_call.1} parent=5 // pred_check_branch
        %155 = sbr.rel (%p153) target = $region24
      $region23: #{tpu_custom_call.1} parent=5 // pred_region
        _
      $region24: #{tpu_custom_call.1} parent=5 // pred_fallthru
        _
      %p156 = scmp.le.s32.totalorder 1, %s22
      %p157 = scmp.lt.s32.totalorder %s22, 3
      %p158 = pnand %p156, %p157
      %p159 = pneg %p158
      // Predicated region
      $region25: #{tpu_custom_call.1} parent=5 // pred_check
        _
      $region26: #{tpu_custom_call.1} parent=5 // pred_check_branch
        %161 = sbr.rel (%p158) target = $region28
      $region27: #{tpu_custom_call.1} parent=5 // pred_region
        %s162 = ssub.s32 %s22, 1
        // Predicated region
        $region29: #{tpu_custom_call.1} parent=27 // pred_check
          %p163 = pneg %p55
        $region30: #{tpu_custom_call.1} parent=27 // pred_check_branch
          %165 = sbr.rel (%p163) target = $region32
        $region31: #{tpu_custom_call.1} parent=27 // pred_region
          %167 = dma.done [#allocation6], 1024
        $region32: #{tpu_custom_call.1} parent=27 // pred_fallthru
          _
        // Predicated region
        $region33: #{tpu_custom_call.1} parent=27 // pred_check
          %p168 = pneg %p81
        $region34: #{tpu_custom_call.1} parent=27 // pred_check_branch
          %170 = sbr.rel (%p168) target = $region36
        $region35: #{tpu_custom_call.1} parent=27 // pred_region
          %172 = dma.done [#allocation9], 128
        $region36: #{tpu_custom_call.1} parent=27 // pred_fallthru
          _
        %p173 = pneg %p55
        %p174 = pneg %p52
        %p175 = pneg %p81
        %p176 = pneg %p78
        %p177 = pneg %p109
        %p178 = pneg %p106
        %s179 = sand.u32 %s96, 1
        %s180 = scalar_lea.sflag [#allocation7], %s179
        %s181 = sand.u32 %s96, 1
        %s182 = smul.addr %s181, 8
        %s183 = scalar_lea.vmem [#allocation10], %s182
        %s184 = smul.u32 %s32, 8
        %s185 = smul.u32 %s31, 8
        %s186 = sadd.s32 %s184, %s185
        %s187 = sld [smem:[#allocation4 + %s186]]
        %p188 = scmp.gt.s32.totalorder %s187, 0
        %s189 = scalar_select %p188, %s187, 0
        %p190 = scmp.lt.s32.totalorder %s189, 63
        %s191 = scalar_select %p190, %s189, 63
        %s192 = scalar_lea.vmem [#allocation5], %s191
        %v193 = vld [vmem:[%s192] sm:$0x1]
        %194 = vst [vmem:[#allocation2] sm:$0x1] %v193
        %s195 = sadd.s32 %s186, 1
        %s196 = sld [smem:[#allocation4 + %s195]]
        %p197 = scmp.gt.s32.totalorder %s196, 0
        %s198 = scalar_select %p197, %s196, 0
        %p199 = scmp.lt.s32.totalorder %s198, 63
        %s200 = scalar_select %p199, %s198, 63
        %s201 = scalar_lea.vmem [#allocation5], %s200
        %v202 = vld [vmem:[%s201] sm:$0x1]
        %203 = vst [vmem:[#allocation2 + $0x1] sm:$0x1] %v202
        %s204 = sadd.s32 %s186, 2
        %s205 = sld [smem:[#allocation4 + %s204]]
        %p206 = scmp.gt.s32.totalorder %s205, 0
        %s207 = scalar_select %p206, %s205, 0
        %p208 = scmp.lt.s32.totalorder %s207, 63
        %s209 = scalar_select %p208, %s207, 63
        %s210 = scalar_lea.vmem [#allocation5], %s209
        %v211 = vld [vmem:[%s210] sm:$0x1]
        %212 = vst [vmem:[#allocation2 + $0x2] sm:$0x1] %v211
        %s213 = sadd.s32 %s186, 3
        %s214 = sld [smem:[#allocation4 + %s213]]
        %p215 = scmp.gt.s32.totalorder %s214, 0
        %s216 = scalar_select %p215, %s214, 0
        %p217 = scmp.lt.s32.totalorder %s216, 63
        %s218 = scalar_select %p217, %s216, 63
        %s219 = scalar_lea.vmem [#allocation5], %s218
        %v220 = vld [vmem:[%s219] sm:$0x1]
        %221 = vst [vmem:[#allocation2 + $0x3] sm:$0x1] %v220
        %s222 = sadd.s32 %s186, 4
        %s223 = sld [smem:[#allocation4 + %s222]]
        %p224 = scmp.gt.s32.totalorder %s223, 0
        %s225 = scalar_select %p224, %s223, 0
        %p226 = scmp.lt.s32.totalorder %s225, 63
        %s227 = scalar_select %p226, %s225, 63
        %s228 = scalar_lea.vmem [#allocation5], %s227
        %v229 = vld [vmem:[%s228] sm:$0x1]
        %230 = vst [vmem:[#allocation2 + $0x4] sm:$0x1] %v229
        %s231 = sadd.s32 %s186, 5
        %s232 = sld [smem:[#allocation4 + %s231]]
        %p233 = scmp.gt.s32.totalorder %s232, 0
        %s234 = scalar_select %p233, %s232, 0
        %p235 = scmp.lt.s32.totalorder %s234, 63
        %s236 = scalar_select %p235, %s234, 63
        %s237 = scalar_lea.vmem [#allocation5], %s236
        %v238 = vld [vmem:[%s237] sm:$0x1]
        %239 = vst [vmem:[#allocation2 + $0x5] sm:$0x1] %v238
        %s240 = sadd.s32 %s186, 6
        %s241 = sld [smem:[#allocation4 + %s240]]
        %p242 = scmp.gt.s32.totalorder %s241, 0
        %s243 = scalar_select %p242, %s241, 0
        %p244 = scmp.lt.s32.totalorder %s243, 63
        %s245 = scalar_select %p244, %s243, 63
        %s246 = scalar_lea.vmem [#allocation5], %s245
        %v247 = vld [vmem:[%s246] sm:$0x1]
        %248 = vst [vmem:[#allocation2 + $0x6] sm:$0x1] %v247
        %s249 = sadd.s32 %s186, 7
        %s250 = sld [smem:[#allocation4 + %s249]]
        %p251 = scmp.gt.s32.totalorder %s250, 0
        %s252 = scalar_select %p251, %s250, 0
        %p253 = scmp.lt.s32.totalorder %s252, 63
        %s254 = scalar_select %p253, %s252, 63
        %s255 = scalar_lea.vmem [#allocation5], %s254
        %v256 = vld [vmem:[%s255] sm:$0x1]
        %257 = vst [vmem:[#allocation2 + $0x7] sm:$0x1] %v256
        %v258 = vld [vmem:[#allocation2] sm:$0xff]
        %v259 = vmul.f32 %v258, 11.313708
        %v260 = vld [vmem:[#allocation8] sm:$0xff]
        %v261 = vadd.f32 %v259, %v260
        %262 = vst [vmem:[%s183] sm:$0xff] %v261
        %s263 = sand.u32 %s96, 1
        %s264 = scalar_lea.sflag [#allocation7], %s263
        %s265 = sand.u32 %s96, 1
        %s266 = smul.addr %s265, 8
        %s267 = scalar_lea.vmem [#allocation10], %s266
        // Predicated region
        $region37: #{tpu_custom_call.1} parent=27 // pred_check
          %p268 = pneg %p106
        $region38: #{tpu_custom_call.1} parent=27 // pred_check_branch
          %270 = sbr.rel (%p268) target = $region40
        $region39: #{tpu_custom_call.1} parent=27 // pred_region
          %272 = vsyncadd %s264, 0
          %s273 = sadd.s32 %s31, %s32
          %s274 = smul.addr %s273, 8
          %s275 = scalar_lea.hbm %s3, %s274
          %s277 = sshll.u32 %s267, 4
          %s278 = int_to_ptr.vmem [resolvable:$true] %s277
          %s279 = sshll.u32 %s275, 4
          %s280 = int_to_ptr.hbm [resolvable:$true] %s279
          %282 = dma.vmem_to_hbm [thread:$0]  %s278, 128, %s280, %s264
        $region40: #{tpu_custom_call.1} parent=27 // pred_fallthru
          _
      $region28: #{tpu_custom_call.1} parent=5 // pred_fallthru
        _
      %p283 = scmp.le.s32.totalorder 2, %s22
      // Predicated region
      $region41: #{tpu_custom_call.1} parent=5 // pred_check
        %p284 = pneg %p283
      $region42: #{tpu_custom_call.1} parent=5 // pred_check_branch
        %286 = sbr.rel (%p284) target = $region44
      $region43: #{tpu_custom_call.1} parent=5 // pred_region
        %s287 = ssub.s32 %s22, 2
        // Predicated region
        $region45: #{tpu_custom_call.1} parent=43 // pred_check
          %p288 = pneg %p112
        $region46: #{tpu_custom_call.1} parent=43 // pred_check_branch
          %290 = sbr.rel (%p288) target = $region48
        $region47: #{tpu_custom_call.1} parent=43 // pred_region
          %s291 = sand.u32 %s97, 1
          %s292 = scalar_lea.sflag [#allocation7], %s291
          %s293 = sand.u32 %s97, 1
          %s294 = smul.addr %s293, 8
          %s295 = scalar_lea.vmem [#allocation10], %s294
          %297 = dma.done %s292, 128
        $region48: #{tpu_custom_call.1} parent=43 // pred_fallthru
          _
      $region44: #{tpu_custom_call.1} parent=5 // pred_fallthru
        _
    $region6: #{tpu_custom_call.1} parent=1 // loop_footer
      %s26 = sadd.s32 1, %s22
    $region7: #{tpu_custom_call.1} parent=1 // loop_footer_branch
      %21 = sbr.rel target = $region3
    $region8: #{tpu_custom_call.1} parent=1 // loop_exit
      _
    %298 = vsyncpa [#allocation6], 1
    %s299 = scalar_lea.sflag [#allocation6], 1
    %300 = vsyncpa %s299, 1
    %301 = vsyncpa [#allocation9], 1
    %302 = vsyncpa [#allocation7], 1
    %s303 = scalar_lea.sflag [#allocation7], 1
    %304 = vsyncpa %s303, 1

</llo_original>
